<compile_context>
chip_gen: v5e
topology: v5e:2x2
jax: 0.10.0
libtpu: 0.0.40
codegen_flags: <defaults>
</compile_context>

<pallas_src>
import functools

import jax
import jax.numpy as jnp
from jax import lax
from jax.experimental import pallas as pl
from jax.experimental.pallas import tpu as pltpu


def _round_up(x, m):
    return ((x + m - 1) // m) * m


# ----------------------------------------------------------------------------
# Kernels
# ----------------------------------------------------------------------------
def _kron_kernel(kt_ref, x_ref, o_ref):
    # kt_ref: (W*L, W*Lp) f32, VMEM-resident; encodes A, B, weight AND the left
    #         time-pad (its first padding_len columns per node are exact zeros).
    # x_ref : (bnv, W*L)  streamed rows of x in natural layout.
    # o_ref : (bnv, W*Lp) padded output rows in natural layout.
    x = x_ref[...]
    if x.dtype != kt_ref.dtype:
        x = x.astype(kt_ref.dtype)
    o_ref[...] = jnp.dot(x, kt_ref[...],
                         preferred_element_type=jnp.float32).astype(o_ref.dtype)


def _slab_fused_kernel(m_ref, x_ref, o_ref):
    # m_ref: (W, W) = weight * (adj_conv @ adj_conv_back)^T   (VMEM resident)
    # x_ref/o_ref: (W, TL) lane-dense tiles.
    x = x_ref[...]
    if x.dtype != m_ref.dtype:
        x = x.astype(m_ref.dtype)
    o_ref[...] = jnp.dot(m_ref[...], x,
                         preferred_element_type=jnp.float32).astype(o_ref.dtype)


def _slab_unfused_kernel(at_ref, bt_ref, x_ref, o_ref, *, sub):
    # at_ref: (D, W) = adj_conv^T                 (resident)
    # bt_ref: (W, D) = weight * adj_conv_back^T   (resident, weight folded in)
    # x_ref/o_ref: (W, TL) lane-dense tiles.
    # Review fix: bound the (D, sub) hidden intermediate by looping over
    # `sub`-lane slices (sub in {128,256,512}) so large lane tiles don't force
    # vreg spills / uncontrolled VMEM growth.
    nsub = x_ref.shape[1] // sub

    def body(j, carry):
        s = pl.multiple_of(j * sub, 128)
        xs = x_ref[:, pl.ds(s, sub)]
        if xs.dtype != at_ref.dtype:
            xs = xs.astype(at_ref.dtype)
        t = jnp.dot(at_ref[...], xs, preferred_element_type=jnp.float32)  # (D, sub)
        # TODO(synk): the real AbstractSTEncoder (self.conv) is dynamically
        # selected in the PyTorch code and unavailable here; identity surrogate.
        y = t
        o_ref[:, pl.ds(s, sub)] = jnp.dot(
            bt_ref[...], y, preferred_element_type=jnp.float32).astype(o_ref.dtype)
        return carry

    lax.fori_loop(0, nsub, body, 0)


# ----------------------------------------------------------------------------
# Path implementations (called inside the jitted wrapper)
# ----------------------------------------------------------------------------
def _kron_path(x, adj_conv, adj_conv_back, weight, padding_len,
               stream_dtype, block_bytes):
    N, V, W, L = x.shape
    Lp = L + padding_len
    NV = N * V
    CI = W * L     # input row width  (natural layout, trailing dims merged)
    CO = W * Lp    # output row width (time-pad included)

    # Fold proj-in, proj-out and the scalar weight: G[w,u] = weight*(A@B)[w,u].
    # Fold the left time-pad via P (L, Lp) with P[l, padding_len + l] = 1:
    #   Kt = kron(G, P)  =>  out2d = x2d @ Kt gives the padded output directly
    # (only valid while the ST encoder is identity — see _slab_unfused_kernel).
    g = weight * jnp.matmul(adj_conv, adj_conv_back,
                            precision=lax.Precision.HIGHEST)           # (W, W)
    p_mat = jnp.zeros((L, Lp), jnp.float32)
    p_mat = p_mat.at[jnp.arange(L), padding_len + jnp.arange(L)].set(1.0)
    kt = jnp.kron(g.astype(jnp.float32), p_mat)                        # (CI, CO)

    itemsize = jnp.dtype(stream_dtype).itemsize
    x2d = x.reshape(NV, CI)                 # free reshape: no layout pass
    if x2d.dtype != stream_dtype:
        x2d = x2d.astype(stream_dtype)

    # Rows per step: target ~block_bytes of streamed input per grid step
    # (amortizes ~0.35us/step), multiple of 8 sublanes, and >= 2 grid steps
    # whenever there is enough work so ("parallel",) can shard across v7x's
    # two TensorCores.
    if NV <= 8:
        bnv = NV
    else:
        bnv = max(block_bytes // max(CI * itemsize, 1), 8)
        bnv = max((bnv // 8) * 8, 8)
        half = _round_up(pl.cdiv(NV, 2), 8)
        bnv = max(8, min(bnv, half))
    grid = (pl.cdiv(NV, bnv),)   # non-divisible tails are masked by Pallas

    vmem_need = CI * CO * 4 + 2 * bnv * (CI + CO) * itemsize
    vmem_limit = int(min(max(int(vmem_need * 1.5) + (4 << 20), 32 << 20), 48 << 20))

    out2d = pl.pallas_call(
        _kron_kernel,
        out_shape=jax.ShapeDtypeStruct((NV, CO), stream_dtype),
        grid=grid,
        in_specs=[pl.BlockSpec((CI, CO), lambda i: (0, 0)),   # Kt, VMEM-resident
                  pl.BlockSpec((bnv, CI), lambda i: (i, 0))],
        out_specs=pl.BlockSpec((bnv, CO), lambda i: (i, 0)),
        compiler_params=pltpu.CompilerParams(
            dimension_semantics=("parallel",),
            vmem_limit_bytes=vmem_limit),
    )(kt, x2d)

    return out2d.reshape(N, V, W, Lp)       # free reshape: no layout pass


def _slab_path(x, adj_conv, adj_conv_back, weight, padding_len,
               fuse_projections, stream_dtype, block_bytes):
    N, V, W, L = x.shape
    D = adj_conv.shape[1]
    C = N * V * L
    itemsize = jnp.dtype(stream_dtype).itemsize

    # TODO(synk): review option (b) — DMA natural-layout tiles and do the
    # (b,W,L)->(W,b*L) shuffle in-kernel with XLU, writing the padded output
    # layout directly — would remove these two XLA layout passes as well; the
    # kron path already covers the common small-W*L regime with zero passes.
    x2 = x.transpose(2, 0, 1, 3).reshape(W, C)
    if x2.dtype != stream_dtype:
        x2 = x2.astype(stream_dtype)

    # Lane tile sized in bytes per grid step; multiple of 128 lanes; capped at
    # 32768; clamped so the grid has >= 2 steps when enough columns exist.
    tl = (block_bytes // max(W * itemsize, 1)) // 128 * 128
    tl = max(128, min(tl, 32768))
    c128 = _round_up(C, 128)
    if c128 > 128:
        tl = min(tl, _round_up(pl.cdiv(c128, 2), 128))
    tl = min(tl, c128)
    c_pad = _round_up(C, tl)               # review #5: always lane-dense blocks
    if c_pad != C:
        x2 = jnp.pad(x2, ((0, 0), (0, c_pad - C)))   # fuses with the transpose copy
    grid = (c_pad // tl,)

    vmem_need = 2 * 2 * W * tl * itemsize + (W * W + 2 * W * D) * 4
    vmem_limit = int(min(max(int(vmem_need * 1.5) + (4 << 20), 32 << 20), 48 << 20))
    compiler_params = pltpu.CompilerParams(
        dimension_semantics=("parallel",),
        vmem_limit_bytes=vmem_limit)

    x_spec = pl.BlockSpec((W, tl), lambda i: (0, i))
    o_spec = pl.BlockSpec((W, tl), lambda i: (0, i))

    if fuse_projections:
        m = (weight * jnp.matmul(adj_conv, adj_conv_back,
                                 precision=lax.Precision.HIGHEST)).T
        out2 = pl.pallas_call(
            _slab_fused_kernel,
            out_shape=jax.ShapeDtypeStruct((W, c_pad), stream_dtype),
            grid=grid,
            in_specs=[pl.BlockSpec((W, W), lambda i: (0, 0)), x_spec],
            out_specs=o_spec,
            compiler_params=compiler_params,
        )(m.astype(jnp.float32), x2)
    else:
        a_t = adj_conv.T.astype(jnp.float32)                  # (D, W)
        b_t = (weight * adj_conv_back.T).astype(jnp.float32)  # (W, D)
        sub = 128
        for cand in (512, 256):
            if tl % cand == 0:
                sub = cand
                break
        out2 = pl.pallas_call(
            functools.partial(_slab_unfused_kernel, sub=sub),
            out_shape=jax.ShapeDtypeStruct((W, c_pad), stream_dtype),
            grid=grid,
            in_specs=[pl.BlockSpec((D, W), lambda i: (0, 0)),
                      pl.BlockSpec((W, D), lambda i: (0, 0)),
                      x_spec],
            out_specs=o_spec,
            compiler_params=compiler_params,
        )(a_t, b_t, x2)

    if c_pad != C:
        out2 = out2[:, :C]
    # Restore (N, V, W, L) and apply the left time-pad on the output (the
    # padded columns are exactly zero in the identity-encoder setting).
    y = out2.reshape(W, N, V, L).transpose(1, 2, 0, 3)
    y = jnp.pad(y, ((0, 0), (0, 0), (0, 0), (padding_len, 0)))
    return y


# ----------------------------------------------------------------------------
# Public entry point
# ----------------------------------------------------------------------------
@functools.partial(jax.jit, static_argnames=("padding_len", "fuse_projections",
                                             "stream_dtype", "block_bytes",
                                             "force_path"))
def md_block_forward(x, adj_conv, adj_conv_back, weight, *,
                     padding_len, fuse_projections=True, stream_dtype=None,
                     block_bytes=4 * 1024 * 1024, force_path=None):
    """MDBlock forward (non-OD path): pad -> A -> [ST encoder] -> B -> *weight.

    x: (N, V, W, L) -> (N, V, W, L + padding_len) in `stream_dtype`
    (default: x.dtype).  `weight` is a runtime scalar (no recompile on change).
    """
    N, V, W, L = x.shape
    Lp = L + padding_len
    if stream_dtype is None:
        stream_dtype = x.dtype
    stream_dtype = jnp.dtype(stream_dtype)
    weight = jnp.asarray(weight, jnp.float32)

    # Path selection: kron path needs the folded (W*L, W*Lp) matrix to fit
    # comfortably in VMEM and assumes the ST encoder is identity; otherwise
    # fall back to the lane-dense slab path.
    kron_bytes = (W * L) * (W * Lp) * 4
    use_kron = fuse_projections and kron_bytes <= (8 << 20)
    if force_path == "slab":
        use_kron = False
    elif force_path == "kron":
        use_kron = True

    if use_kron:
        return _kron_path(x, adj_conv, adj_conv_back, weight, padding_len,
                          stream_dtype, block_bytes)
    return _slab_path(x, adj_conv, adj_conv_back, weight, padding_len,
                      fuse_projections, stream_dtype, block_bytes)


def _reference(x, adj_conv, adj_conv_back, padding_len, weight):
    x_pad = jnp.pad(x, ((0, 0), (0, 0), (0, 0), (padding_len, 0)))
    t = jnp.einsum('nvwl,wd->nvdl', x_pad, adj_conv)
    y = jnp.einsum('nvcl,cw->nvwl', t, adj_conv_back)
    return weight * y


if __name__ == "__main__":
    # Small synthetic config mirroring MDBlock.__init__ shapes:
    #   num_nodes = 16, c_hid = 32, input_len = 8, origin L = 6 -> padding_len = 2
    #   weighted_aggregate: temporal_index=0, p=2 -> temporal_weight = 0.5
    N, V, W, L = 2, 4, 16, 6
    D = 32
    padding_len = 2
    temporal_weight = pow(0.5, 0) / 2.0   # temporal_index != p-1 -> /2
    spatio_weight = 1.0                   # TODO(synk): decomposition_batch.get_spatio_weight is external
    weight = temporal_weight * spatio_weight

    key = jax.random.PRNGKey(0)
    kx, ka, kb, kx2 = jax.random.split(key, 4)
    x = jax.random.normal(kx, (N, V, W, L), dtype=jnp.float32)
    adj_conv = jax.random.normal(ka, (W, D), dtype=jnp.float32)       # (num_nodes, c_hid)
    adj_conv_back = jax.random.normal(kb, (D, W), dtype=jnp.float32)  # (c_hid, num_nodes)

    ref = _reference(x, adj_conv, adj_conv_back, padding_len, weight)

    # 1) Default (kron) path: natural layout in/out, pad fused, zero layout passes.
    y = md_block_forward(x, adj_conv, adj_conv_back, weight, padding_len=padding_len)
    y = jax.block_until_ready(y)
    assert y.shape == (N, V, W, L + padding_len), y.shape
    assert jnp.allclose(y, ref, rtol=1e-3, atol=1e-3), \
        float(jnp.max(jnp.abs(y - ref)))

    # 2) Slab fallback path: fused and unfused (identity-encoder surrogate).
    y_slab = md_block_forward(x, adj_conv, adj_conv_back, weight,
                              padding_len=padding_len, force_path="slab")
    y_unf = md_block_forward(x, adj_conv, adj_conv_back, weight,
                             padding_len=padding_len, force_path="slab",
                             fuse_projections=False)
    jax.block_until_ready((y_slab, y_unf))
    assert jnp.allclose(y_slab, ref, rtol=1e-3, atol=1e-3), \
        float(jnp.max(jnp.abs(y_slab - ref)))
    assert jnp.allclose(y_unf, ref, rtol=1e-3, atol=1e-3), \
        float(jnp.max(jnp.abs(y_unf - ref)))

    # 3) Larger shape: exercises the multi-step parallel grid on both paths
    #    (kron: 2 row-blocks; slab: 2 lane tiles with the sub-slice loop).
    N2, V2, L2 = 4, 8, 24
    x_big = jax.random.normal(kx2, (N2, V2, W, L2), dtype=jnp.float32)
    ref_big = _reference(x_big, adj_conv, adj_conv_back, padding_len, weight)
    y_big = md_block_forward(x_big, adj_conv, adj_conv_back, weight,
                             padding_len=padding_len)
    y_big_slab = md_block_forward(x_big, adj_conv, adj_conv_back, weight,
                                  padding_len=padding_len, force_path="slab",
                                  fuse_projections=False)
    jax.block_until_ready((y_big, y_big_slab))
    assert y_big.shape == (N2, V2, W, L2 + padding_len), y_big.shape
    assert jnp.allclose(y_big, ref_big, rtol=1e-3, atol=1e-3), \
        float(jnp.max(jnp.abs(y_big - ref_big)))
    assert jnp.allclose(y_big_slab, ref_big, rtol=1e-3, atol=1e-3), \
        float(jnp.max(jnp.abs(y_big_slab - ref_big)))

    # 4) bf16 streaming of the activations (halves HBM traffic; f32 accumulate).
    y_bf16 = md_block_forward(x_big, adj_conv, adj_conv_back, weight,
                              padding_len=padding_len, stream_dtype=jnp.bfloat16)
    y_bf16 = jax.block_until_ready(y_bf16)
    err = float(jnp.max(jnp.abs(y_bf16.astype(jnp.float32) - ref_big)))
    scale = float(jnp.max(jnp.abs(ref_big)))
    assert err <= 0.05 * scale, (err, scale)

    print("KERNEL_OK")
</pallas_src>

<mosaic_0001>
module attributes {stable_mosaic.version = 11 : i64} {
  func.func @_kron_kernel(%arg0: i32, %arg1: memref<96x128xf32, #tpu.memory_space<vmem>>, %arg2: memref<8x96xf32, #tpu.memory_space<vmem>>, %arg3: memref<8x128xf32, #tpu.memory_space<vmem>>) attributes {dimension_semantics = [#tpu.dimension_semantics<parallel>], iteration_bounds = array<i64: 1>, scalar_prefetch = 0 : i64, scratch_operands = 0 : i64, tpu.core_type = #tpu.core_type<tc>, window_params = [{pipeline_mode = #tpu.pipeline_mode<synchronous>, transform_indices = @transform_0, window_bounds = array<i64: 96, 128>}, {transform_indices = @transform_1, window_bounds = array<i64: 8, 96>}, {transform_indices = @transform_2, window_bounds = array<i64: 8, 128>}]} {
    %c0 = arith.constant 0 : index
    %c0_0 = arith.constant 0 : index
    %0 = vector.load %arg2[%c0, %c0_0] : memref<8x96xf32, #tpu.memory_space<vmem>>, vector<8x96xf32>
    %c0_1 = arith.constant 0 : index
    %c0_2 = arith.constant 0 : index
    %1 = vector.load %arg1[%c0_1, %c0_2] : memref<96x128xf32, #tpu.memory_space<vmem>>, vector<96x128xf32>
    %cst = arith.constant dense<0.000000e+00> : vector<8x128xf32>
    %2 = tpu.matmul %0, %1, %cst {dimension_numbers = #tpu.dot_dimension_numbers<[1], [0], [0], [1], [0, 0, 1, 1], [], []>} : vector<8x96xf32>, vector<96x128xf32>, vector<8x128xf32> -> vector<8x128xf32>
    %c0_3 = arith.constant 0 : index
    %c0_4 = arith.constant 0 : index
    %3 = vector.load %arg3[%c0_3, %c0_4] : memref<8x128xf32, #tpu.memory_space<vmem>>, vector<8x128xf32>
    tpu.vector_store %arg3[%c0_3, %c0_4], %2 {strides = array<i32>} : memref<8x128xf32, #tpu.memory_space<vmem>>, vector<8x128xf32>,
    return
  }
  func.func @transform_0(%arg0: i32) -> (i32, i32) {
    %c0_i32 = arith.constant 0 : i32
    %c0_i32_0 = arith.constant 0 : i32
    %c0_i32_1 = arith.constant 0 : i32
    return %c0_i32, %c0_i32_0 : i32, i32
  }
  func.func @transform_1(%arg0: i32) -> (i32, i32) {
    %c0_i32 = arith.constant 0 : i32
    %c0_i32_0 = arith.constant 0 : i32
    return %arg0, %c0_i32 : i32, i32
  }
  func.func @transform_2(%arg0: i32) -> (i32, i32) {
    %c0_i32 = arith.constant 0 : i32
    %c0_i32_0 = arith.constant 0 : i32
    return %arg0, %c0_i32 : i32, i32
  }
}

</mosaic_0001>

<llo_original>
// kernel: md_block_forward.1
$region0: #{md_block_forward.1}
  #allocation0 [shape = 'u32[]', space=smem, size = 0x4, offset = 0x4, fixed_abs, tag = 'smem constant byte address 0x4 - core index']
  #allocation1 [shape = 'u32[72,128]{1,0:T(1,128)}', space=vmem, size = 0x9000, scoped, tag = 'internal scratch']
  %s0 = inlined_call_operand.vmem [shape: f32[96,128], index: 0, kind: input, shape index: {}]
  %s1 = inlined_call_operand.vmem [shape: f32[8,96], index: 1, kind: input, shape index: {}]
  %s2 = inlined_call_operand.vmem [shape: f32[8,128], index: 2, kind: output, shape index: {}]
  %s3 = sld [smem:[#allocation0]]
  $region18: #{md_block_forward.1} parent=0
    _
  %s5 = ssub.s32 1, %s3
  %s6 = scalar_select 0, %s5, %s3
  // Predicated region
  $region2: #{md_block_forward.1} parent=0 // pred_check
    _
  $region3: #{md_block_forward.1} parent=0 // pred_check_branch
    %8 = sbr.rel (0) target = $region5
  $region4: #{md_block_forward.1} parent=0 // pred_region
    _
  $region5: #{md_block_forward.1} parent=0 // pred_fallthru
    _
  // Predicated region
  $region6: #{md_block_forward.1} parent=0 // pred_check
    _
  $region7: #{md_block_forward.1} parent=0 // pred_check_branch
    %10 = sbr.rel (0) target = $region9
  $region8: #{md_block_forward.1} parent=0 // pred_region
    _
  $region9: #{md_block_forward.1} parent=0 // pred_fallthru
    _
  %v11 = vld [vmem:[%s1] sm:$0xff]
  %v12 = vld [vmem:[%s0] sm:$0xff]
  %v13 = vld [vmem:[%s0 + $0x8] sm:$0xff]
  %v14 = vld [vmem:[%s0 + $0x10] sm:$0xff]
  %v15 = vld [vmem:[%s0 + $0x18] sm:$0xff]
  %v16 = vld [vmem:[%s0 + $0x20] sm:$0xff]
  %v17 = vld [vmem:[%s0 + $0x28] sm:$0xff]
  %v18 = vld [vmem:[%s0 + $0x30] sm:$0xff]
  %v19 = vld [vmem:[%s0 + $0x38] sm:$0xff]
  %v20 = vld [vmem:[%s0 + $0x40] sm:$0xff]
  %v21 = vld [vmem:[%s0 + $0x48] sm:$0xff]
  %v22 = vld [vmem:[%s0 + $0x50] sm:$0xff]
  %v23 = vld [vmem:[%s0 + $0x58] sm:$0xff]
  %vm24 = vcmask 785408
  %v26 = vsel %vm24, %v11, 0
  %28 = vmatpush.msra.mxu0 0.0
  %29 = vmatpush.msra.mxu0 0.0
  %30 = vmatpush.msra.mxu0 0.0
  %31 = vmatpush.msra.mxu0 0.0
  %32 = vmatpush.msra.mxu0 %v23
  %33 = vmatpush.msra.mxu0 %v22
  %34 = vmatpush.msra.mxu0 %v21
  %35 = vmatpush.msra.mxu0 %v20
  %36 = vmatpush.msra.mxu0 %v19
  %37 = vmatpush.msra.mxu0 %v18
  %38 = vmatpush.msra.mxu0 %v17
  %39 = vmatpush.msra.mxu0 %v16
  %40 = vmatpush.msra.mxu0 %v15
  %41 = vmatpush.msra.mxu0 %v14
  %42 = vmatpush.msra.mxu0 %v13
  %43 = vmatpush.msra.mxu0 %v12
  %44 = vmatmul.f32.gmra.mxu0 %v26
  %v45 = vpop.f32.mrf.mxu0
  %v46 = vadd.f32 0.0, %v45
  %47 = vdwg.mxu0
  %48 = vst [vmem:[%s2] sm:$0xff] %v46
  // Predicated region
  $region10: #{md_block_forward.1} parent=0 // pred_check
    _
  $region11: #{md_block_forward.1} parent=0 // pred_check_branch
    %50 = sbr.rel (0) target = $region13
  $region12: #{md_block_forward.1} parent=0 // pred_region
    _
  $region13: #{md_block_forward.1} parent=0 // pred_fallthru
    _
  // Predicated region
  $region14: #{md_block_forward.1} parent=0 // pred_check
    _
  $region15: #{md_block_forward.1} parent=0 // pred_check_branch
    %52 = sbr.rel (0) target = $region17
  $region16: #{md_block_forward.1} parent=0 // pred_region
    _
  $region17: #{md_block_forward.1} parent=0 // pred_fallthru
    _

</llo_original>
